<compile_context>
chip_gen: v7x
topology: tpu7x:2x2x1
jax: 0.10.0
libtpu: 0.0.40
codegen_flags: <defaults>
</compile_context>

<pallas_src>
import functools

import jax
import jax.numpy as jnp
from jax.experimental import pallas as pl
from jax.experimental.pallas import tpu as pltpu


def _pick_block_b(batch):
    """Largest batch tile (rows) that divides B; candidates sized for VMEM."""
    for t in (2048, 1024, 512, 256, 128, 64, 32, 16, 8):
        if batch % t == 0:
            return t
    return batch  # batch not a multiple of 8: single whole-batch block


# --------------- pass 1: stats (+ fused embed/scale/add when training) -------

def _stats_train_kernel(c_ref, lw_ref, embed_ref, noise_ref,
                        x_ref, psum_ref, psumsq_ref):
    """c (TILE_B,1) i32 | lw (1,) SMEM | table (C,D) resident | noise (TILE_B,D)
       -> x (TILE_B,D), per-lane Sum(x) (1,D), Sum(x*x) (1,D) accumulators."""
    bt, _ = noise_ref.shape
    n_cls = embed_ref.shape[0]

    @pl.when(pl.program_id(0) == 0)
    def _init():
        psum_ref[...] = jnp.zeros_like(psum_ref)
        psumsq_ref[...] = jnp.zeros_like(psumsq_ref)

    # One-hot gather on the MXU: onehot (TILE_B, C) @ table (C, D) -> (TILE_B, D).
    onehot = (jax.lax.broadcasted_iota(jnp.int32, (bt, n_cls), 1)
              == c_ref[...]).astype(jnp.float32)
    emb = jnp.dot(onehot, embed_ref[...], preferred_element_type=jnp.float32)
    x = emb * jax.nn.sigmoid(lw_ref[0]) + noise_ref[...]
    x_ref[...] = x

    # Fused Sum(x) / Sum(x*x): both sublane reductions issued back-to-back.
    psum_ref[...] += jnp.sum(x, axis=0, keepdims=True)
    psumsq_ref[...] += jnp.sum(x * x, axis=0, keepdims=True)


def _stats_eval_kernel(noise_ref, psum_ref, psumsq_ref):
    """Eval path: whitening stats of noise only; no table / id inputs at all."""
    @pl.when(pl.program_id(0) == 0)
    def _init():
        psum_ref[...] = jnp.zeros_like(psum_ref)
        psumsq_ref[...] = jnp.zeros_like(psumsq_ref)

    x = noise_ref[...]
    psum_ref[...] += jnp.sum(x, axis=0, keepdims=True)
    psumsq_ref[...] += jnp.sum(x * x, axis=0, keepdims=True)


# --------------- pass 2: global whitening ------------------------------------

def _normalize_kernel(stats_ref, x_ref, out_ref):
    """stats (2,) SMEM = [mean, rstd]; out = (x - mean) * rstd."""
    out_ref[...] = (x_ref[...] - stats_ref[0]) * stats_ref[1]


# --------------- wrapper ------------------------------------------------------

@functools.partial(jax.jit, static_argnames=("c_training", "block_b"))
def cond_embedding_forward(noise, c, embed_table, label_weight, *,
                           c_training=False, block_b=None):
    """noise: (B, D) f32, c: (B,) int, embed_table: (C, D) f32, label_weight: (1,) f32."""
    batch, dim = noise.shape
    tb = _pick_block_b(batch) if block_b is None else block_b
    grid = (batch // tb,)

    tile = pl.BlockSpec((tb, dim), lambda i: (i, 0))
    lane_acc = pl.BlockSpec((1, dim), lambda i: (0, 0))          # resident accumulator
    vmem_whole = pl.BlockSpec(memory_space=pltpu.MemorySpace.VMEM)
    smem_whole = pl.BlockSpec(memory_space=pltpu.MemorySpace.SMEM)

    if c_training:
        c2d = c.reshape(batch, 1).astype(jnp.int32)
        x, psum, psumsq = pl.pallas_call(
            _stats_train_kernel,
            grid=grid,
            out_shape=(jax.ShapeDtypeStruct((batch, dim), jnp.float32),
                       jax.ShapeDtypeStruct((1, dim), jnp.float32),
                       jax.ShapeDtypeStruct((1, dim), jnp.float32)),
            in_specs=[pl.BlockSpec((tb, 1), lambda i: (i, 0)),    # class ids
                      smem_whole,                                  # label_weight
                      vmem_whole,                                  # table, resident
                      tile],                                       # noise
            out_specs=(tile, lane_acc, lane_acc),
            compiler_params=pltpu.CompilerParams(
                dimension_semantics=("arbitrary",)),               # reduction axis
        )(c2d, label_weight, embed_table, noise)
    else:
        # Eval: x is just noise; do not DMA the table or the ids at all.
        x = noise
        psum, psumsq = pl.pallas_call(
            _stats_eval_kernel,
            grid=grid,
            out_shape=(jax.ShapeDtypeStruct((1, dim), jnp.float32),
                       jax.ShapeDtypeStruct((1, dim), jnp.float32)),
            in_specs=[tile],
            out_specs=(lane_acc, lane_acc),
            compiler_params=pltpu.CompilerParams(
                dimension_semantics=("arbitrary",)),
        )(noise)

    # Tiny scalar epilogue (lane reduction of the (1, D) partials).
    n = batch * dim
    total = jnp.sum(psum)
    total_sq = jnp.sum(psumsq)
    mean = total / n
    var = (total_sq - n * mean * mean) / (n - 1)      # unbiased (torch .std() ddof=1)
    stats = jnp.stack([mean, jax.lax.rsqrt(var)]).astype(jnp.float32)

    out = pl.pallas_call(
        _normalize_kernel,
        grid=grid,
        out_shape=jax.ShapeDtypeStruct((batch, dim), jnp.float32),
        in_specs=[smem_whole, tile],
        out_specs=tile,
        compiler_params=pltpu.CompilerParams(
            dimension_semantics=("parallel",)),                    # megacore split
    )(stats, x)
    return out


# --------------- reference ----------------------------------------------------

def _reference(noise, c, embed_table, label_weight, *, c_training=False):
    emb = embed_table[c]
    if c_training:
        x = emb * jax.nn.sigmoid(label_weight[0]) + noise
    else:
        x = noise
    mean = jnp.mean(x)
    std = jnp.sqrt(jnp.sum((x - mean) ** 2) / (x.size - 1))
    return (x - mean) / std


if __name__ == "__main__":
    n_classes = 10
    embedding_dim = 128   # module default
    batch = 32            # small, but with block_b=8 gives a 4-step grid so the
                          # tiled accumulate / normalize path is exercised

    key = jax.random.PRNGKey(0)
    k_embed, k_noise, k_c = jax.random.split(key, 3)

    # Parameter shapes match the torch module:
    #   nn.Embedding(n_classes, embedding_dim) -> (n_classes, embedding_dim)
    #   label_weight = nn.Parameter(torch.zeros(1))
    embed_table = jax.random.normal(k_embed, (n_classes, embedding_dim),
                                    dtype=jnp.float32)
    label_weight = jnp.zeros((1,), dtype=jnp.float32)

    noise = jax.random.normal(k_noise, (batch, embedding_dim),
                              dtype=jnp.float32)
    # c=None branch of the torch forward (random class ids per batch element),
    # generated deterministically here and passed in as an int32 array.
    c = jax.random.randint(k_c, (batch,), 0, n_classes, dtype=jnp.int32)

    out_train = cond_embedding_forward(noise, c, embed_table, label_weight,
                                       c_training=True, block_b=8)
    out_eval = cond_embedding_forward(noise, c, embed_table, label_weight,
                                      c_training=False, block_b=8)
    jax.block_until_ready(out_train)
    jax.block_until_ready(out_eval)

    ref_train = _reference(noise, c, embed_table, label_weight,
                           c_training=True)
    ref_eval = _reference(noise, c, embed_table, label_weight,
                          c_training=False)
    assert jnp.allclose(out_train, ref_train, rtol=1e-5, atol=1e-5)
    assert jnp.allclose(out_eval, ref_eval, rtol=1e-5, atol=1e-5)

    print("KERNEL_OK")
</pallas_src>

<mosaic_0001>
module attributes {stable_mosaic.version = 11 : i64} {
  func.func @_stats_train_kernel(%arg0: i32, %arg1: memref<8x1xi32, #tpu.memory_space<vmem>>, %arg2: memref<1xf32, #tpu.memory_space<smem>>, %arg3: memref<10x128xf32, #tpu.memory_space<vmem>>, %arg4: memref<8x128xf32, #tpu.memory_space<vmem>>, %arg5: memref<8x128xf32, #tpu.memory_space<vmem>>, %arg6: memref<1x128xf32, #tpu.memory_space<vmem>>, %arg7: memref<1x128xf32, #tpu.memory_space<vmem>>) attributes {dimension_semantics = [#tpu.dimension_semantics<arbitrary>], iteration_bounds = array<i64: 4>, scalar_prefetch = 0 : i64, scratch_operands = 0 : i64, tpu.core_type = #tpu.core_type<tc>, window_params = [{transform_indices = @transform_0, window_bounds = array<i64: 8, 1>}, {transform_indices = @transform_1, window_bounds = array<i64: 1>}, {pipeline_mode = #tpu.pipeline_mode<synchronous>, transform_indices = @transform_2, window_bounds = array<i64: 10, 128>}, {transform_indices = @transform_3, window_bounds = array<i64: 8, 128>}, {transform_indices = @transform_4, window_bounds = array<i64: 8, 128>}, {pipeline_mode = #tpu.pipeline_mode<synchronous>, transform_indices = @transform_5, window_bounds = array<i64: 1, 128>}, {pipeline_mode = #tpu.pipeline_mode<synchronous>, transform_indices = @transform_6, window_bounds = array<i64: 1, 128>}]} {
    %c0_i32 = arith.constant 0 : i32
    %0 = arith.cmpi eq, %arg0, %c0_i32 : i32
    %1 = arith.extui %0 : i1 to i32
    %c0_i32_0 = arith.constant 0 : i32
    %2 = arith.cmpi ne, %1, %c0_i32_0 : i32
    scf.if %2 {
      %cst_20 = arith.constant 0.000000e+00 : f32
      %32 = vector.broadcast %cst_20 : f32 to vector<1x128xf32>
      %c0_21 = arith.constant 0 : index
      %c0_22 = arith.constant 0 : index
      %33 = vector.load %arg6[%c0_21, %c0_22] : memref<1x128xf32, #tpu.memory_space<vmem>>, vector<1x128xf32>
      tpu.vector_store %arg6[%c0_21, %c0_22], %32 {strides = array<i32>} : memref<1x128xf32, #tpu.memory_space<vmem>>, vector<1x128xf32>,
      %cst_23 = arith.constant 0.000000e+00 : f32
      %34 = vector.broadcast %cst_23 : f32 to vector<1x128xf32>
      %c0_24 = arith.constant 0 : index
      %c0_25 = arith.constant 0 : index
      %35 = vector.load %arg7[%c0_24, %c0_25] : memref<1x128xf32, #tpu.memory_space<vmem>>, vector<1x128xf32>
      tpu.vector_store %arg7[%c0_24, %c0_25], %34 {strides = array<i32>} : memref<1x128xf32, #tpu.memory_space<vmem>>, vector<1x128xf32>,
    } else {
    }
    %3 = tpu.iota {dimensions = array<i32: 1>} : vector<8x10xi32>
    %c0 = arith.constant 0 : index
    %c0_1 = arith.constant 0 : index
    %4 = vector.load %arg1[%c0, %c0_1] : memref<8x1xi32, #tpu.memory_space<vmem>>, vector<8x1xi32>
    %5 = vector.broadcast %4 : vector<8x1xi32> to vector<8x10xi32>
    %6 = arith.cmpi eq, %3, %5 : vector<8x10xi32>
    %7 = arith.extui %6 : vector<8x10xi1> to vector<8x10xi32>
    %8 = arith.sitofp %7 : vector<8x10xi32> to vector<8x10xf32>
    %c0_2 = arith.constant 0 : index
    %c0_3 = arith.constant 0 : index
    %9 = vector.load %arg3[%c0_2, %c0_3] : memref<10x128xf32, #tpu.memory_space<vmem>>, vector<10x128xf32>
    %cst = arith.constant dense<0.000000e+00> : vector<8x128xf32>
    %10 = tpu.matmul %8, %9, %cst {dimension_numbers = #tpu.dot_dimension_numbers<[1], [0], [0], [1], [0, 0, 1, 1], [], []>} : vector<8x10xf32>, vector<10x128xf32>, vector<8x128xf32> -> vector<8x128xf32>
    %c0_4 = arith.constant 0 : index
    %11 = memref.load %arg2[%c0_4] : memref<1xf32, #tpu.memory_space<smem>>
    %12 = arith.negf %11 : f32
    %13 = math.exp %12 : f32
    %cst_5 = arith.constant 1.000000e+00 : f32
    %14 = arith.addf %cst_5, %13 : f32
    %15 = arith.divf %cst_5, %14 : f32
    %16 = vector.broadcast %15 : f32 to vector<8x128xf32>
    %17 = arith.mulf %10, %16 : vector<8x128xf32>
    %c0_6 = arith.constant 0 : index
    %c0_7 = arith.constant 0 : index
    %18 = vector.load %arg4[%c0_6, %c0_7] : memref<8x128xf32, #tpu.memory_space<vmem>>, vector<8x128xf32>
    %19 = arith.addf %17, %18 : vector<8x128xf32>
    %c0_8 = arith.constant 0 : index
    %c0_9 = arith.constant 0 : index
    %20 = vector.load %arg5[%c0_8, %c0_9] : memref<8x128xf32, #tpu.memory_space<vmem>>, vector<8x128xf32>
    tpu.vector_store %arg5[%c0_8, %c0_9], %19 {strides = array<i32>} : memref<8x128xf32, #tpu.memory_space<vmem>>, vector<8x128xf32>,
    %c0_10 = arith.constant 0 : index
    %c0_11 = arith.constant 0 : index
    %21 = vector.load %arg6[%c0_10, %c0_11] : memref<1x128xf32, #tpu.memory_space<vmem>>, vector<1x128xf32>
    %cst_12 = arith.constant dense<0.000000e+00> : vector<128xf32>
    %22 = vector.multi_reduction <add>, %19, %cst_12 [0] : vector<8x128xf32> to vector<128xf32>
    %23 = vector.shape_cast %22 : vector<128xf32> to vector<1x128xf32>
    %24 = arith.addf %21, %23 : vector<1x128xf32>
    %c0_13 = arith.constant 0 : index
    %c0_14 = arith.constant 0 : index
    %25 = vector.load %arg6[%c0_13, %c0_14] : memref<1x128xf32, #tpu.memory_space<vmem>>, vector<1x128xf32>
    tpu.vector_store %arg6[%c0_13, %c0_14], %24 {strides = array<i32>} : memref<1x128xf32, #tpu.memory_space<vmem>>, vector<1x128xf32>,
    %c0_15 = arith.constant 0 : index
    %c0_16 = arith.constant 0 : index
    %26 = vector.load %arg7[%c0_15, %c0_16] : memref<1x128xf32, #tpu.memory_space<vmem>>, vector<1x128xf32>
    %27 = arith.mulf %19, %19 : vector<8x128xf32>
    %cst_17 = arith.constant dense<0.000000e+00> : vector<128xf32>
    %28 = vector.multi_reduction <add>, %27, %cst_17 [0] : vector<8x128xf32> to vector<128xf32>
    %29 = vector.shape_cast %28 : vector<128xf32> to vector<1x128xf32>
    %30 = arith.addf %26, %29 : vector<1x128xf32>
    %c0_18 = arith.constant 0 : index
    %c0_19 = arith.constant 0 : index
    %31 = vector.load %arg7[%c0_18, %c0_19] : memref<1x128xf32, #tpu.memory_space<vmem>>, vector<1x128xf32>
    tpu.vector_store %arg7[%c0_18, %c0_19], %30 {strides = array<i32>} : memref<1x128xf32, #tpu.memory_space<vmem>>, vector<1x128xf32>,
    return
  }
  func.func @transform_0(%arg0: i32) -> (i32, i32) {
    %c0_i32 = arith.constant 0 : i32
    %c0_i32_0 = arith.constant 0 : i32
    return %arg0, %c0_i32 : i32, i32
  }
  func.func @transform_1(%arg0: i32) -> i32 {
    %c0_i32 = arith.constant 0 : i32
    %c0_i32_0 = arith.constant 0 : i32
    return %c0_i32 : i32
  }
  func.func @transform_2(%arg0: i32) -> (i32, i32) {
    %c0_i32 = arith.constant 0 : i32
    %c0_i32_0 = arith.constant 0 : i32
    %c0_i32_1 = arith.constant 0 : i32
    return %c0_i32, %c0_i32_0 : i32, i32
  }
  func.func @transform_3(%arg0: i32) -> (i32, i32) {
    %c0_i32 = arith.constant 0 : i32
    %c0_i32_0 = arith.constant 0 : i32
    return %arg0, %c0_i32 : i32, i32
  }
  func.func @transform_4(%arg0: i32) -> (i32, i32) {
    %c0_i32 = arith.constant 0 : i32
    %c0_i32_0 = arith.constant 0 : i32
    return %arg0, %c0_i32 : i32, i32
  }
  func.func @transform_5(%arg0: i32) -> (i32, i32) {
    %c0_i32 = arith.constant 0 : i32
    %c0_i32_0 = arith.constant 0 : i32
    %c0_i32_1 = arith.constant 0 : i32
    return %c0_i32, %c0_i32_0 : i32, i32
  }
  func.func @transform_6(%arg0: i32) -> (i32, i32) {
    %c0_i32 = arith.constant 0 : i32
    %c0_i32_0 = arith.constant 0 : i32
    %c0_i32_1 = arith.constant 0 : i32
    return %c0_i32, %c0_i32_0 : i32, i32
  }
}

module attributes {stable_mosaic.version = 11 : i64} {
  func.func @_normalize_kernel(%arg0: i32, %arg1: memref<2xf32, #tpu.memory_space<smem>>, %arg2: memref<8x128xf32, #tpu.memory_space<vmem>>, %arg3: memref<8x128xf32, #tpu.memory_space<vmem>>) attributes {dimension_semantics = [#tpu.dimension_semantics<parallel>], iteration_bounds = array<i64: 4>, scalar_prefetch = 0 : i64, scratch_operands = 0 : i64, tpu.core_type = #tpu.core_type<tc>, window_params = [{transform_indices = @transform_0, window_bounds = array<i64: 2>}, {transform_indices = @transform_1, window_bounds = array<i64: 8, 128>}, {transform_indices = @transform_2, window_bounds = array<i64: 8, 128>}]} {
    %c0 = arith.constant 0 : index
    %c0_0 = arith.constant 0 : index
    %0 = vector.load %arg2[%c0, %c0_0] : memref<8x128xf32, #tpu.memory_space<vmem>>, vector<8x128xf32>
    %c0_1 = arith.constant 0 : index
    %1 = memref.load %arg1[%c0_1] : memref<2xf32, #tpu.memory_space<smem>>
    %2 = vector.broadcast %1 : f32 to vector<8x128xf32>
    %3 = arith.subf %0, %2 : vector<8x128xf32>
    %c1 = arith.constant 1 : index
    %4 = memref.load %arg1[%c1] : memref<2xf32, #tpu.memory_space<smem>>
    %5 = vector.broadcast %4 : f32 to vector<8x128xf32>
    %6 = arith.mulf %3, %5 : vector<8x128xf32>
    %c0_2 = arith.constant 0 : index
    %c0_3 = arith.constant 0 : index
    %7 = vector.load %arg3[%c0_2, %c0_3] : memref<8x128xf32, #tpu.memory_space<vmem>>, vector<8x128xf32>
    tpu.vector_store %arg3[%c0_2, %c0_3], %6 {strides = array<i32>} : memref<8x128xf32, #tpu.memory_space<vmem>>, vector<8x128xf32>,
    return
  }
  func.func @transform_0(%arg0: i32) -> i32 {
    %c0_i32 = arith.constant 0 : i32
    %c0_i32_0 = arith.constant 0 : i32
    return %c0_i32 : i32
  }
  func.func @transform_1(%arg0: i32) -> (i32, i32) {
    %c0_i32 = arith.constant 0 : i32
    %c0_i32_0 = arith.constant 0 : i32
    return %arg0, %c0_i32 : i32, i32
  }
  func.func @transform_2(%arg0: i32) -> (i32, i32) {
    %c0_i32 = arith.constant 0 : i32
    %c0_i32_0 = arith.constant 0 : i32
    return %arg0, %c0_i32 : i32, i32
  }
}

</mosaic_0001>

<llo_original>
// kernel: cond_embedding_forward.3
$region0: #{cond_embedding_forward.3}
  #allocation0 [shape = 'u32[]', space=smem, size = 0x4, offset = 0x4, fixed_abs, tag = 'smem constant byte address 0x4 - core index']
  #allocation1 [shape = 'u32[144,128]{1,0:T(1,128)}', space=vmem, size = 0x12000, scoped, tag = 'internal scratch']
  %s0 = inlined_call_operand.vmem [shape: f32[2], index: 0, kind: input, shape index: {}]
  %s1 = inlined_call_operand.vmem [shape: f32[32,128], index: 1, kind: input, shape index: {}]
  %s2 = inlined_call_operand.hbm [shape: f32[32,128], index: 2, kind: output, shape index: {}]
  %s3 = sld [smem:[#allocation0]]
  $region45: #{cond_embedding_forward.3} parent=0
    _
  %s5 = ssub.s32 1, %s3
  %s6 = scalar_select 0, %s5, %s3
  $region1: #{cond_embedding_forward.3} parent=0
    #allocation2 [shape = 'u8[512]{0}', space=smem, size = 0x200, scoped, tag = 'input window, operand 0, single buffered']
    #allocation3 [shape = 's32[2]{0}', space=sflag, size = 0x8, scoped, tag = 'scoped memory for cond_embedding_forward.3']
    #allocation4 [shape = 's32[2]{0}', space=sflag, size = 0x8, scoped, tag = 'scoped memory for cond_embedding_forward.3']
    #allocation5 [shape = 'u8[8192]{0}', space=vmem, size = 0x2000, scoped, tag = 'output window, operand 0']
    %7 = vsyncpa [#allocation4], 0
    %8 = vsyncpa [#allocation3], 0
    %s9 = scalar_lea.sflag [#allocation3], 1
    %10 = vsyncpa %s9, 0
    loop: start=0, step=1, limit=6
    $region2: #{cond_embedding_forward.3} parent=1 // loop_pre_header
      _
    $region3: #{cond_embedding_forward.3} parent=1 // loop_header
      %s12 = sphi 0, %s16
      %p13 = scmp.ge.s32.totalorder %s12, 6
      %s20 = sphi 0, %s20
      %s22 = sphi 0, %s20
      %s23 = sphi 0, %s22
      %s37 = sphi 0, %s23
      %s43 = sphi 0, %s45
      %s46 = sphi 0, %s43
      %s47 = sphi 0, %s46
      %s63 = sphi 0, %s47
      %s69 = sphi 0, %s71
      %s72 = sphi 0, %s69
      %s73 = sphi 0, %s72
      %s89 = sphi 0, %s73
    $region4: #{cond_embedding_forward.3} parent=1 // loop_header_branch
      %15 = sbr.rel (%p13) target = $region8
    $region5: #{cond_embedding_forward.3} parent=1 // loop_body
      %s17 = ssub.s32 %s12, 1
      %s18 = ssub.s32 %s12, 2
      %s19 = sadd.s32 %s12, 1
      %s21 = sadd.s32 %s20, 1
      %p24 = scmp.eq.s32.totalorder %s12, 3
      %p25 = scmp.ne.s32.totalorder %s20, %s22
      %p26 = scmp.eq.s32.totalorder %s12, 0
      %p27 = por %p25, %p26
      %p28 = scmp.ne.s32.totalorder %s20, %s22
      %p29 = scmp.eq.s32.totalorder %s17, 3
      %p30 = por %p28, %p29
      %p31 = scmp.ne.s32.totalorder %s22, %s23
      %p32 = scmp.eq.s32.totalorder %s17, 0
      %p33 = por %p31, %p32
      %p34 = scmp.ne.s32.totalorder %s22, %s23
      %p35 = scmp.eq.s32.totalorder %s18, 3
      %p36 = por %p34, %p35
      %p38 = scmp.ne.s32.totalorder %s23, %s37
      %p39 = scmp.eq.s32.totalorder %s18, 0
      %p40 = por %p38, %p39
      %s41 = ssub.s32 %s12, %s19
      %p42 = scmp.eq.s32.totalorder %s41, 0
      %s44 = sadd.s32 %s43, 1
      %s45 = scalar_select %p42, %s43, %s44
      %p48 = pneg %p42
      %p49 = scmp.eq.s32.totalorder %s12, 3
      %p50 = por %p48, %p49
      %p51 = scmp.ne.s32.totalorder %s43, %s46
      %p52 = scmp.eq.s32.totalorder %s12, 0
      %p53 = por %p51, %p52
      %p54 = scmp.ne.s32.totalorder %s43, %s46
      %p55 = scmp.eq.s32.totalorder %s17, 3
      %p56 = por %p54, %p55
      %p57 = scmp.ne.s32.totalorder %s46, %s47
      %p58 = scmp.eq.s32.totalorder %s17, 0
      %p59 = por %p57, %p58
      %p60 = scmp.ne.s32.totalorder %s46, %s47
      %p61 = scmp.eq.s32.totalorder %s18, 3
      %p62 = por %p60, %p61
      %p64 = scmp.ne.s32.totalorder %s47, %s63
      %p65 = scmp.eq.s32.totalorder %s18, 0
      %p66 = por %p64, %p65
      %s67 = ssub.s32 %s12, %s19
      %p68 = scmp.eq.s32.totalorder %s67, 0
      %s70 = sadd.s32 %s69, 1
      %s71 = scalar_select %p68, %s69, %s70
      %p74 = pneg %p68
      %p75 = scmp.eq.s32.totalorder %s12, 3
      %p76 = por %p74, %p75
      %p77 = scmp.ne.s32.totalorder %s69, %s72
      %p78 = scmp.eq.s32.totalorder %s12, 0
      %p79 = por %p77, %p78
      %p80 = scmp.ne.s32.totalorder %s69, %s72
      %p81 = scmp.eq.s32.totalorder %s17, 3
      %p82 = por %p80, %p81
      %p83 = scmp.ne.s32.totalorder %s72, %s73
      %p84 = scmp.eq.s32.totalorder %s17, 0
      %p85 = por %p83, %p84
      %p86 = scmp.ne.s32.totalorder %s72, %s73
      %p87 = scmp.eq.s32.totalorder %s18, 3
      %p88 = por %p86, %p87
      %p90 = scmp.ne.s32.totalorder %s73, %s89
      %p91 = scmp.eq.s32.totalorder %s18, 0
      %p92 = por %p90, %p91
      %p93 = scmp.le.s32.totalorder 1, %s12
      %p94 = scmp.lt.s32.totalorder %s12, 5
      %p95 = pnand %p93, %p94
      %p96 = pneg %p95
      // Predicated region
      $region9: #{cond_embedding_forward.3} parent=5 // pred_check
        _
      $region10: #{cond_embedding_forward.3} parent=5 // pred_check_branch
        %98 = sbr.rel (%p95) target = $region12
      $region11: #{cond_embedding_forward.3} parent=5 // pred_region
        %s99 = ssub.s32 %s12, 1
        // Predicated region
        $region13: #{cond_embedding_forward.3} parent=11 // pred_check
          %p100 = pneg %p33
        $region14: #{cond_embedding_forward.3} parent=11 // pred_check_branch
          %102 = sbr.rel (%p100) target = $region16
        $region15: #{cond_embedding_forward.3} parent=11 // pred_region
          %s104 = ssub.s32 16, 16
          %105 = vsyncadd [#allocation4], %s104
          %s107 = sshll.u32 %s0, 4
          %s108 = int_to_ptr.vmem [resolvable:$true] %s107
          %110 = dma.vmem_to_smem %s108, 16, [#allocation2], [#allocation4]
        $region16: #{cond_embedding_forward.3} parent=11 // pred_fallthru
          _
      $region12: #{cond_embedding_forward.3} parent=5 // pred_fallthru
        _
      %p111 = scmp.lt.s32.totalorder %s12, 4
      // Predicated region
      $region17: #{cond_embedding_forward.3} parent=5 // pred_check
        %p112 = pneg %p111
      $region18: #{cond_embedding_forward.3} parent=5 // pred_check_branch
        %114 = sbr.rel (%p112) target = $region20
      $region19: #{cond_embedding_forward.3} parent=5 // pred_region
        // Predicated region
        $region21: #{cond_embedding_forward.3} parent=19 // pred_check
          %p115 = pneg %p53
        $region22: #{cond_embedding_forward.3} parent=19 // pred_check_branch
          %117 = sbr.rel (%p115) target = $region24
        $region23: #{cond_embedding_forward.3} parent=19 // pred_region
          %p118 = scmp.lt.s32.totalorder %s12, 3
          %s119 = scalar_select %p118, %s12, 3
          %s120 = smul.addr %s119, 8
          %s121 = scalar_lea.vmem %s1, %s120
        $region24: #{cond_embedding_forward.3} parent=19 // pred_fallthru
          _
      $region20: #{cond_embedding_forward.3} parent=5 // pred_fallthru
        _
      %p122 = scmp.le.s32.totalorder 1, %s12
      %p123 = scmp.lt.s32.totalorder %s12, 5
      %p124 = pnand %p122, %p123
      %p125 = pneg %p124
      // Predicated region
      $region25: #{cond_embedding_forward.3} parent=5 // pred_check
        _
      $region26: #{cond_embedding_forward.3} parent=5 // pred_check_branch
        %127 = sbr.rel (%p124) target = $region28
      $region27: #{cond_embedding_forward.3} parent=5 // pred_region
        %s128 = ssub.s32 %s12, 1
        // Predicated region
        $region29: #{cond_embedding_forward.3} parent=27 // pred_check
          %p129 = pneg %p33
        $region30: #{cond_embedding_forward.3} parent=27 // pred_check_branch
          %131 = sbr.rel (%p129) target = $region32
        $region31: #{cond_embedding_forward.3} parent=27 // pred_region
          %132 = dma.done [#allocation4], 16
        $region32: #{cond_embedding_forward.3} parent=27 // pred_fallthru
          _
        %133 = sfence
        %p134 = pneg %p33
        %p135 = pneg %p30
        %p136 = scmp.lt.s32.totalorder %s17, 3
        %s137 = scalar_select %p136, %s17, 3
        %s138 = smul.addr %s137, 8
        %s139 = scalar_lea.vmem %s1, %s138
        %p140 = pneg %p59
        %p141 = pneg %p56
        %p142 = pneg %p85
        %p143 = pneg %p82
        %s144 = sand.u32 %s72, 1
        %s145 = scalar_lea.sflag [#allocation3], %s144
        %s146 = sand.u32 %s72, 1
        %s147 = smul.addr %s146, 8
        %s148 = scalar_lea.vmem [#allocation5], %s147
        %p149 = scmp.lt.s32.totalorder %s17, 3
        %s150 = scalar_select %p149, %s17, 3
        %s151 = smul.addr %s150, 8
        %s152 = scalar_lea.vmem %s1, %s151
        %v153 = vld [vmem:[%s152] sm:$0xff]
        %s154 = sld [smem:[#allocation2]]
        %v155 = vstv %s154
        %v156 = vsub.f32 %v153, %v155
        %s157 = sld [smem:[#allocation2 + $0x1]]
        %v158 = vstv %s157
        %v159 = vmul.f32 %v156, %v158
        %160 = vst [vmem:[%s148] sm:$0xff] %v159
        %s161 = sand.u32 %s72, 1
        %s162 = scalar_lea.sflag [#allocation3], %s161
        %s163 = sand.u32 %s72, 1
        %s164 = smul.addr %s163, 8
        %s165 = scalar_lea.vmem [#allocation5], %s164
        // Predicated region
        $region33: #{cond_embedding_forward.3} parent=27 // pred_check
          %p166 = pneg %p82
        $region34: #{cond_embedding_forward.3} parent=27 // pred_check_branch
          %168 = sbr.rel (%p166) target = $region36
        $region35: #{cond_embedding_forward.3} parent=27 // pred_region
          %s170 = ssub.s32 128, 128
          %171 = vsyncadd %s162, %s170
          %s172 = smul.addr %s17, 128
          %s173 = scalar_lea.hbm %s2, %s172
          %s175 = sshll.u32 %s165, 4
          %s176 = int_to_ptr.vmem [resolvable:$true] %s175
          %178 = dma.vmem_to_hbm [thread:$0]  %s176, 128, %s173, %s162
        $region36: #{cond_embedding_forward.3} parent=27 // pred_fallthru
          _
      $region28: #{cond_embedding_forward.3} parent=5 // pred_fallthru
        _
      %p179 = scmp.le.s32.totalorder 2, %s12
      // Predicated region
      $region37: #{cond_embedding_forward.3} parent=5 // pred_check
        %p180 = pneg %p179
      $region38: #{cond_embedding_forward.3} parent=5 // pred_check_branch
        %182 = sbr.rel (%p180) target = $region40
      $region39: #{cond_embedding_forward.3} parent=5 // pred_region
        %s183 = ssub.s32 %s12, 2
        // Predicated region
        $region41: #{cond_embedding_forward.3} parent=39 // pred_check
          %p184 = pneg %p88
        $region42: #{cond_embedding_forward.3} parent=39 // pred_check_branch
          %186 = sbr.rel (%p184) target = $region44
        $region43: #{cond_embedding_forward.3} parent=39 // pred_region
          %s187 = sand.u32 %s73, 1
          %s188 = scalar_lea.sflag [#allocation3], %s187
          %s189 = sand.u32 %s73, 1
          %s190 = smul.addr %s189, 8
          %s191 = scalar_lea.vmem [#allocation5], %s190
          %192 = dma.done %s188, 128
        $region44: #{cond_embedding_forward.3} parent=39 // pred_fallthru
          _
      $region40: #{cond_embedding_forward.3} parent=5 // pred_fallthru
        _
    $region6: #{cond_embedding_forward.3} parent=1 // loop_footer
      %s16 = sadd.s32 1, %s12
    $region7: #{cond_embedding_forward.3} parent=1 // loop_footer_branch
      %11 = sbr.rel target = $region3
    $region8: #{cond_embedding_forward.3} parent=1 // loop_exit
      _
    %193 = vsyncpa [#allocation3], 1
    %s194 = scalar_lea.sflag [#allocation3], 1
    %195 = vsyncpa %s194, 1
    %196 = vsyncpa [#allocation4], 1
    %s197 = scalar_lea.sflag [#allocation4], 1
    %198 = vsyncpa %s197, 1

// kernel: cond_embedding_forward.2
$region0: #{cond_embedding_forward.2}
  #allocation0 [shape = 'u32[]', space=smem, size = 0x4, offset = 0x4, fixed_abs, tag = 'smem constant byte address 0x4 - core index']
  #allocation1 [shape = 'u32[144,128]{1,0:T(1,128)}', space=vmem, size = 0x12000, scoped, tag = 'internal scratch']
  #allocation2 [shape = 'f32[1]{0:T(128)S(6)}', space=smem, size = 0x200, scoped, tag = 'scoped memory for cond_embedding_forward.2']
  %s0 = inlined_call_operand.vmem [shape: s32[32,1], index: 0, kind: input, shape index: {}]
  %s1 = inlined_call_operand.<no memory space> [shape: f32[1], index: 1, kind: input, shape index: {}]
  %s2 = inlined_call_operand.vmem [shape: f32[10,128], index: 2, kind: input, shape index: {}]
  %s3 = inlined_call_operand.vmem [shape: f32[32,128], index: 3, kind: input, shape index: {}]
  %s4 = inlined_call_operand.vmem [shape: f32[32,128], index: 4, kind: output, shape index: {0}]
  %s5 = inlined_call_operand.vmem [shape: f32[1,128], index: 5, kind: output, shape index: {1}]
  %s6 = inlined_call_operand.vmem [shape: f32[1,128], index: 6, kind: output, shape index: {2}]
  %7 = xla_tuple %s4, %s5, %s6
  %s8 = sld [smem:[#allocation0]]
  $region69: #{cond_embedding_forward.2} parent=0
    _
  %s10 = ssub.s32 1, %s8
  %s11 = scalar_select 0, %s10, %s8
  %12 = sst [smem:[#allocation2]] %s1
  loop: start=0, step=1, limit=6
  $region2: #{cond_embedding_forward.2} parent=0 // loop_pre_header
    _
  $region3: #{cond_embedding_forward.2} parent=0 // loop_header
    %s14 = sphi 0, %s18
    %p15 = scmp.ge.s32.totalorder %s14, 6
    %s24 = sphi 0, %s26
    %s27 = sphi 0, %s24
    %s28 = sphi 0, %s27
    %s44 = sphi 0, %s28
    %s48 = sphi 0, %s48
    %s50 = sphi 0, %s48
    %s51 = sphi 0, %s50
    %s65 = sphi 0, %s51
    %s69 = sphi 0, %s69
    %s71 = sphi 0, %s69
    %s72 = sphi 0, %s71
    %s86 = sphi 0, %s72
    %s92 = sphi 0, %s94
    %s95 = sphi 0, %s92
    %s96 = sphi 0, %s95
    %s112 = sphi 0, %s96
    %s118 = sphi 0, %s120
    %s121 = sphi 0, %s118
    %s122 = sphi 0, %s121
    %s138 = sphi 0, %s122
    %s142 = sphi 0, %s142
    %s144 = sphi 0, %s142
    %s145 = sphi 0, %s144
    %s159 = sphi 0, %s145
    %s163 = sphi 0, %s163
    %s165 = sphi 0, %s163
    %s166 = sphi 0, %s165
    %s180 = sphi 0, %s166
  $region4: #{cond_embedding_forward.2} parent=0 // loop_header_branch
    %17 = sbr.rel (%p15) target = $region8
  $region5: #{cond_embedding_forward.2} parent=0 // loop_body
    %s19 = ssub.s32 %s14, 1
    %s20 = ssub.s32 %s14, 2
    %s21 = sadd.s32 %s14, 1
    %s22 = ssub.s32 %s14, %s21
    %p23 = scmp.eq.s32.totalorder %s22, 0
    %s25 = sadd.s32 %s24, 1
    %s26 = scalar_select %p23, %s24, %s25
    %p29 = pneg %p23
    %p30 = scmp.eq.s32.totalorder %s14, 3
    %p31 = por %p29, %p30
    %p32 = scmp.ne.s32.totalorder %s24, %s27
    %p33 = scmp.eq.s32.totalorder %s14, 0
    %p34 = por %p32, %p33
    %p35 = scmp.ne.s32.totalorder %s24, %s27
    %p36 = scmp.eq.s32.totalorder %s19, 3
    %p37 = por %p35, %p36
    %p38 = scmp.ne.s32.totalorder %s27, %s28
    %p39 = scmp.eq.s32.totalorder %s19, 0
    %p40 = por %p38, %p39
    %p41 = scmp.ne.s32.totalorder %s27, %s28
    %p42 = scmp.eq.s32.totalorder %s20, 3
    %p43 = por %p41, %p42
    %p45 = scmp.ne.s32.totalorder %s28, %s44
    %p46 = scmp.eq.s32.totalorder %s20, 0
    %p47 = por %p45, %p46
    %s49 = sadd.s32 %s48, 1
    %p52 = scmp.eq.s32.totalorder %s14, 3
    %p53 = scmp.ne.s32.totalorder %s48, %s50
    %p54 = scmp.eq.s32.totalorder %s14, 0
    %p55 = por %p53, %p54
    %p56 = scmp.ne.s32.totalorder %s48, %s50
    %p57 = scmp.eq.s32.totalorder %s19, 3
    %p58 = por %p56, %p57
    %p59 = scmp.ne.s32.totalorder %s50, %s51
    %p60 = scmp.eq.s32.totalorder %s19, 0
    %p61 = por %p59, %p60
    %p62 = scmp.ne.s32.totalorder %s50, %s51
    %p63 = scmp.eq.s32.totalorder %s20, 3
    %p64 = por %p62, %p63
    %p66 = scmp.ne.s32.totalorder %s51, %s65
    %p67 = scmp.eq.s32.totalorder %s20, 0
    %p68 = por %p66, %p67
    %s70 = sadd.s32 %s69, 1
    %p73 = scmp.eq.s32.totalorder %s14, 3
    %p74 = scmp.ne.s32.totalorder %s69, %s71
    %p75 = scmp.eq.s32.totalorder %s14, 0
    %p76 = por %p74, %p75
    %p77 = scmp.ne.s32.totalorder %s69, %s71
    %p78 = scmp.eq.s32.totalorder %s19, 3
    %p79 = por %p77, %p78
    %p80 = scmp.ne.s32.totalorder %s71, %s72
    %p81 = scmp.eq.s32.totalorder %s19, 0
    %p82 = por %p80, %p81
    %p83 = scmp.ne.s32.totalorder %s71, %s72
    %p84 = scmp.eq.s32.totalorder %s20, 3
    %p85 = por %p83, %p84
    %p87 = scmp.ne.s32.totalorder %s72, %s86
    %p88 = scmp.eq.s32.totalorder %s20, 0
    %p89 = por %p87, %p88
    %s90 = ssub.s32 %s14, %s21
    %p91 = scmp.eq.s32.totalorder %s90, 0
    %s93 = sadd.s32 %s92, 1
    %s94 = scalar_select %p91, %s92, %s93
    %p97 = pneg %p91
    %p98 = scmp.eq.s32.totalorder %s14, 3
    %p99 = por %p97, %p98
    %p100 = scmp.ne.s32.totalorder %s92, %s95
    %p101 = scmp.eq.s32.totalorder %s14, 0
    %p102 = por %p100, %p101
    %p103 = scmp.ne.s32.totalorder %s92, %s95
    %p104 = scmp.eq.s32.totalorder %s19, 3
    %p105 = por %p103, %p104
    %p106 = scmp.ne.s32.totalorder %s95, %s96
    %p107 = scmp.eq.s32.totalorder %s19, 0
    %p108 = por %p106, %p107
    %p109 = scmp.ne.s32.totalorder %s95, %s96
    %p110 = scmp.eq.s32.totalorder %s20, 3
    %p111 = por %p109, %p110
    %p113 = scmp.ne.s32.totalorder %s96, %s112
    %p114 = scmp.eq.s32.totalorder %s20, 0
    %p115 = por %p113, %p114
    %s116 = ssub.s32 %s14, %s21
    %p117 = scmp.eq.s32.totalorder %s116, 0
    %s119 = sadd.s32 %s118, 1
    %s120 = scalar_select %p117, %s118, %s119
    %p123 = pneg %p117
    %p124 = scmp.eq.s32.totalorder %s14, 3
    %p125 = por %p123, %p124
    %p126 = scmp.ne.s32.totalorder %s118, %s121
    %p127 = scmp.eq.s32.totalorder %s14, 0
    %p128 = por %p126, %p127
    %p129 = scmp.ne.s32.totalorder %s118, %s121
    %p130 = scmp.eq.s32.totalorder %s19, 3
    %p131 = por %p129, %p130
    %p132 = scmp.ne.s32.totalorder %s121, %s122
    %p133 = scmp.eq.s32.totalorder %s19, 0
    %p134 = por %p132, %p133
    %p135 = scmp.ne.s32.totalorder %s121, %s122
    %p136 = scmp.eq.s32.totalorder %s20, 3
    %p137 = por %p135, %p136
    %p139 = scmp.ne.s32.totalorder %s122, %s138
    %p140 = scmp.eq.s32.totalorder %s20, 0
    %p141 = por %p139, %p140
    %s143 = sadd.s32 %s142, 1
    %p146 = scmp.eq.s32.totalorder %s14, 3
    %p147 = scmp.ne.s32.totalorder %s142, %s144
    %p148 = scmp.eq.s32.totalorder %s14, 0
    %p149 = por %p147, %p148
    %p150 = scmp.ne.s32.totalorder %s142, %s144
    %p151 = scmp.eq.s32.totalorder %s19, 3
    %p152 = por %p150, %p151
    %p153 = scmp.ne.s32.totalorder %s144, %s145
    %p154 = scmp.eq.s32.totalorder %s19, 0
    %p155 = por %p153, %p154
    %p156 = scmp.ne.s32.totalorder %s144, %s145
    %p157 = scmp.eq.s32.totalorder %s20, 3
    %p158 = por %p156, %p157
    %p160 = scmp.ne.s32.totalorder %s145, %s159
    %p161 = scmp.eq.s32.totalorder %s20, 0
    %p162 = por %p160, %p161
    %s164 = sadd.s32 %s163, 1
    %p167 = scmp.eq.s32.totalorder %s14, 3
    %p168 = scmp.ne.s32.totalorder %s163, %s165
    %p169 = scmp.eq.s32.totalorder %s14, 0
    %p170 = por %p168, %p169
    %p171 = scmp.ne.s32.totalorder %s163, %s165
    %p172 = scmp.eq.s32.totalorder %s19, 3
    %p173 = por %p171, %p172
    %p174 = scmp.ne.s32.totalorder %s165, %s166
    %p175 = scmp.eq.s32.totalorder %s19, 0
    %p176 = por %p174, %p175
    %p177 = scmp.ne.s32.totalorder %s165, %s166
    %p178 = scmp.eq.s32.totalorder %s20, 3
    %p179 = por %p177, %p178
    %p181 = scmp.ne.s32.totalorder %s166, %s180
    %p182 = scmp.eq.s32.totalorder %s20, 0
    %p183 = por %p181, %p182
    %p184 = scmp.le.s32.totalorder 1, %s14
    %p185 = scmp.lt.s32.totalorder %s14, 5
    %p186 = pnand %p184, %p185
    %p187 = pneg %p186
    // Predicated region
    $region9: #{cond_embedding_forward.2} parent=5 // pred_check
      _
    $region10: #{cond_embedding_forward.2} parent=5 // pred_check_branch
      %189 = sbr.rel (%p186) target = $region12
    $region11: #{cond_embedding_forward.2} parent=5 // pred_region
      %s190 = ssub.s32 %s14, 1
      // Predicated region
      $region13: #{cond_embedding_forward.2} parent=11 // pred_check
        %p191 = pneg %p61
      $region14: #{cond_embedding_forward.2} parent=11 // pred_check_branch
        %193 = sbr.rel (%p191) target = $region16
      $region15: #{cond_embedding_forward.2} parent=11 // pred_region
        _
      $region16: #{cond_embedding_forward.2} parent=11 // pred_fallthru
        _
      // Predicated region
      $region17: #{cond_embedding_forward.2} parent=11 // pred_check
        %p194 = pneg %p82
      $region18: #{cond_embedding_forward.2} parent=11 // pred_check_branch
        %196 = sbr.rel (%p194) target = $region20
      $region19: #{cond_embedding_forward.2} parent=11 // pred_region
        _
      $region20: #{cond_embedding_forward.2} parent=11 // pred_fallthru
        _
    $region12: #{cond_embedding_forward.2} parent=5 // pred_fallthru
      _
    %p197 = scmp.lt.s32.totalorder %s14, 4
    // Predicated region
    $region21: #{cond_embedding_forward.2} parent=5 // pred_check
      %p198 = pneg %p197
    $region22: #{cond_embedding_forward.2} parent=5 // pred_check_branch
      %200 = sbr.rel (%p198) target = $region24
    $region23: #{cond_embedding_forward.2} parent=5 // pred_region
      // Predicated region
      $region25: #{cond_embedding_forward.2} parent=23 // pred_check
        %p201 = pneg %p34
      $region26: #{cond_embedding_forward.2} parent=23 // pred_check_branch
        %203 = sbr.rel (%p201) target = $region28
      $region27: #{cond_embedding_forward.2} parent=23 // pred_region
        %p204 = scmp.lt.s32.totalorder %s14, 3
        %s205 = scalar_select %p204, %s14, 3
        %s206 = smul.addr %s205, 8
        %s207 = scalar_lea.vmem %s0, %s206
      $region28: #{cond_embedding_forward.2} parent=23 // pred_fallthru
        _
      // Predicated region
      $region29: #{cond_embedding_forward.2} parent=23 // pred_check
        %p208 = pneg %p102
      $region30: #{cond_embedding_forward.2} parent=23 // pred_check_branch
        %210 = sbr.rel (%p208) target = $region32
      $region31: #{cond_embedding_forward.2} parent=23 // pred_region
        %p211 = scmp.lt.s32.totalorder %s14, 3
        %s212 = scalar_select %p211, %s14, 3
        %s213 = smul.addr %s212, 8
        %s214 = scalar_lea.vmem %s3, %s213
      $region32: #{cond_embedding_forward.2} parent=23 // pred_fallthru
        _
    $region24: #{cond_embedding_forward.2} parent=5 // pred_fallthru
      _
    %p215 = scmp.le.s32.totalorder 1, %s14
    %p216 = scmp.lt.s32.totalorder %s14, 5
    %p217 = pnand %p215, %p216
    %p218 = pneg %p217
    // Predicated region
    $region33: #{cond_embedding_forward.2} parent=5 // pred_check
      _
    $region34: #{cond_embedding_forward.2} parent=5 // pred_check_branch
      %220 = sbr.rel (%p217) target = $region36
    $region35: #{cond_embedding_forward.2} parent=5 // pred_region
      %s221 = ssub.s32 %s14, 1
      %p222 = scmp.lt.s32.totalorder %s19, 3
      %s223 = scalar_select %p222, %s19, 3
      %s224 = smul.addr %s223, 8
      %s225 = scalar_lea.vmem %s0, %s224
      %p226 = pneg %p40
      %p227 = pneg %p37
      %p228 = pneg %p61
      %p229 = pneg %p58
      %p230 = pneg %p82
      %p231 = pneg %p79
      %p232 = scmp.lt.s32.totalorder %s19, 3
      %s233 = scalar_select %p232, %s19, 3
      %s234 = smul.addr %s233, 8
      %s235 = scalar_lea.vmem %s3, %s234
      %p236 = pneg %p108
      %p237 = pneg %p105
      %p238 = pneg %p134
      %p239 = pneg %p131
      %p240 = scmp.lt.s32.totalorder %s19, 3
      %s241 = scalar_select %p240, %s19, 3
      %s242 = smul.addr %s241, 8
      %s243 = scalar_lea.vmem %s4, %s242
      %p244 = pneg %p155
      %p245 = pneg %p152
      %p246 = pneg %p176
      %p247 = pneg %p173
      %p248 = scmp.lt.s32.totalorder %s19, 3
      %s249 = scalar_select %p248, %s19, 3
      %s250 = smul.addr %s249, 8
      %s251 = scalar_lea.vmem %s0, %s250
      %p252 = scmp.lt.s32.totalorder %s19, 3
      %s253 = scalar_select %p252, %s19, 3
      %s254 = smul.addr %s253, 8
      %s255 = scalar_lea.vmem %s3, %s254
      %p256 = scmp.lt.s32.totalorder %s19, 3
      %s257 = scalar_select %p256, %s19, 3
      %s258 = smul.addr %s257, 8
      %s259 = scalar_lea.vmem %s4, %s258
      %p260 = scmp.eq.s32.totalorder %s19, 0
      // Predicated region
      $region37: #{cond_embedding_forward.2} parent=35 // pred_check
        %p261 = pneg %p260
      $region38: #{cond_embedding_forward.2} parent=35 // pred_check_branch
        %263 = sbr.rel (%p261) target = $region40
      $region39: #{cond_embedding_forward.2} parent=35 // pred_region
        %264 = vst [vmem:[%s5] sm:$0x1] 0.0
        %265 = vst [vmem:[%s6] sm:$0x1] 0.0
      $region40: #{cond_embedding_forward.2} parent=35 // pred_fallthru
        _
      %v266 = vlaneseq
      %v267 = vand.u32 %v266, 127
      %v268 = vld [vmem:[%s251] sm:$0xff]
      %269 = vset.pattern.permute.xlu0 0
      %270 = vperm.xlu0 %269, %v268
      %v271 = vpop.permute.xlu0 %270
      %vm272 = vcmp.eq.s32.totalorder %v267, %v271
      %v273 = vsel %vm272, 1, 0
      %v274 = vcvt.s32.f32 %v273
      %v275 = vld [vmem:[%s2] sm:$0xff]
      %v276 = vld [vmem:[%s2 + $0x8] sm:$0x3]
      %vm277 = vcmask 80896
      %v279 = vsel %vm277, %v274, 0
      %vm281 = vcmask 1041408
      %v283 = vsel %vm281, %v276, 0
      %285 = vmatprep.subr.mxu0 0.0
      %286 = vmatpush1.msra.mxu0 %v275
      %287 = vmatprep.subr.mxu0 0.0
      %288 = vmatpush1.msra.mxu0 %v283
      %289 = vmatprep.subr.mxu0 0.0
      %290 = vmatpush1.msra.mxu0 0.0
      %291 = vmatprep.subr.mxu0 0.0
      %292 = vmatpush1.msra.mxu0 0.0
      %293 = vmatprep.subr.mxu0 0.0
      %294 = vmatpush1.msra.mxu0 0.0
      %295 = vmatprep.subr.mxu0 0.0
      %296 = vmatpush1.msra.mxu0 0.0
      %297 = vmatprep.subr.mxu0 0.0
      %298 = vmatpush1.msra.mxu0 0.0
      %299 = vmatprep.subr.mxu0 0.0
      %300 = vmatpush1.msra.mxu0 0.0
      %301 = vmatprep.subr.mxu0 0.0
      %302 = vmatpush1.msra.mxu0 0.0
      %303 = vmatprep.subr.mxu0 0.0
      %304 = vmatpush1.msra.mxu0 0.0
      %305 = vmatprep.subr.mxu0 0.0
      %306 = vmatpush1.msra.mxu0 0.0
      %307 = vmatprep.subr.mxu0 0.0
      %308 = vmatpush1.msra.mxu0 0.0
      %309 = vmatprep.subr.mxu0 0.0
      %310 = vmatpush1.msra.mxu0 0.0
      %311 = vmatprep.subr.mxu0 0.0
      %312 = vmatpush1.msra.mxu0 0.0
      %313 = vmatprep.subr.mxu0 0.0
      %314 = vmatpush1.msra.mxu0 0.0
      %315 = vmatprep.subr.mxu0 0.0
      %316 = vmatpush1.msra.mxu0 0.0
      %317 = vmatprep.subr.mxu0 0.0
      %318 = vmatpush1.msra.mxu0 0.0
      %319 = vmatprep.subr.mxu0 0.0
      %320 = vmatpush1.msra.mxu0 0.0
      %321 = vmatprep.subr.mxu0 0.0
      %322 = vmatpush1.msra.mxu0 0.0
      %323 = vmatprep.subr.mxu0 0.0
      %324 = vmatpush1.msra.mxu0 0.0
      %325 = vmatprep.subr.mxu0 0.0
      %326 = vmatpush1.msra.mxu0 0.0
      %327 = vmatprep.subr.mxu0 0.0
      %328 = vmatpush1.msra.mxu0 0.0
      %329 = vmatprep.subr.mxu0 0.0
      %330 = vmatpush1.msra.mxu0 0.0
      %331 = vmatprep.subr.mxu0 0.0
      %332 = vmatpush1.msra.mxu0 0.0
      %333 = vmatprep.subr.mxu0 0.0
      %334 = vmatpush1.msra.mxu0 0.0
      %335 = vmatprep.subr.mxu0 0.0
      %336 = vmatpush1.msra.mxu0 0.0
      %337 = vmatprep.subr.mxu0 0.0
      %338 = vmatpush1.msra.mxu0 0.0
      %339 = vmatprep.subr.mxu0 0.0
      %340 = vmatpush1.msra.mxu0 0.0
      %341 = vmatprep.subr.mxu0 0.0
      %342 = vmatpush1.msra.mxu0 0.0
      %343 = vmatprep.subr.mxu0 0.0
      %344 = vmatpush1.msra.mxu0 0.0
      %345 = vmatprep.subr.mxu0 0.0
      %346 = vmatpush1.msra.mxu0 0.0
      %347 = vmatprep.subr.mxu0 0.0
      %348 = vmatpush1.msra.mxu0 0.0
      %349 = vmatprep.mubr.f32.mxu0 0.0
      %350 = vmatmul.mubr.f32.gmra.mrb[0].mxu0 %v279
      %v351 = vpop.f32.mrb[0].mxu0
      %v352 = vadd.f32 0.0, %v351
      %v353 = vpop.f32.mrb[0].mxu0
      %354 = vdwg.mxu0
      %s355 = sld [smem:[#allocation2]]
      %s356 = sxor.u32 %s355, 2147483648
      %v357 = vstv %s356
      %v358 = vmul.f32 %v357, 1.442695
      %v359 = vpow.pop %v358
      %s360 = vtos %v359
      %s361 = sadd.f32 %s360, 1.0
      %v362 = vstv %s361
      %v363 = vrcp.pop %v362
      %s364 = vtos %v363
      %v365 = vstv %s364
      %v366 = vmul.f32 %v352, %v365
      %v367 = vld [vmem:[%s255] sm:$0xff]
      %v368 = vadd.f32 %v366, %v367
      %369 = vst [vmem:[%s259] sm:$0xff] %v368
      %v370 = vld [vmem:[%s5] sm:$0x1]
      %v371 = vrot.slane %v368, 4
      %v372 = vadd.f32 %v368, %v371
      %v373 = vrot.slane %v372, 2
      %v374 = vadd.f32 %v372, %v373
      %v375 = vrot.slane %v374, 1
      %v376 = vadd.f32 %v374, %v375
      %v377 = vadd.f32 %v370, %v376
      %378 = vst [vmem:[%s5] sm:$0x1] %v377
      %v379 = vld [vmem:[%s6] sm:$0x1]
      %v380 = vmul.f32 %v368, %v368
      %v381 = vrot.slane %v380, 4
      %v382 = vadd.f32 %v380, %v381
      %v383 = vrot.slane %v382, 2
      %v384 = vadd.f32 %v382, %v383
      %v385 = vrot.slane %v384, 1
      %v386 = vadd.f32 %v384, %v385
      %v387 = vadd.f32 %v379, %v386
      %388 = vst [vmem:[%s6] sm:$0x1] %v387
      %p389 = scmp.lt.s32.totalorder %s19, 3
      %s390 = scalar_select %p389, %s19, 3
      %s391 = smul.addr %s390, 8
      %s392 = scalar_lea.vmem %s4, %s391
      // Predicated region
      $region41: #{cond_embedding_forward.2} parent=35 // pred_check
        %p393 = pneg %p131
      $region42: #{cond_embedding_forward.2} parent=35 // pred_check_branch
        %395 = sbr.rel (%p393) target = $region44
      $region43: #{cond_embedding_forward.2} parent=35 // pred_region
        _
      $region44: #{cond_embedding_forward.2} parent=35 // pred_fallthru
        _
      // Predicated region
      $region45: #{cond_embedding_forward.2} parent=35 // pred_check
        %p396 = pneg %p152
      $region46: #{cond_embedding_forward.2} parent=35 // pred_check_branch
        %398 = sbr.rel (%p396) target = $region48
      $region47: #{cond_embedding_forward.2} parent=35 // pred_region
        _
      $region48: #{cond_embedding_forward.2} parent=35 // pred_fallthru
        _
      // Predicated region
      $region49: #{cond_embedding_forward.2} parent=35 // pred_check
        %p399 = pneg %p173
      $region50: #{cond_embedding_forward.2} parent=35 // pred_check_branch
        %401 = sbr.rel (%p399) target = $region52
      $region51: #{cond_embedding_forward.2} parent=35 // pred_region
        _
      $region52: #{cond_embedding_forward.2} parent=35 // pred_fallthru
        _
      // Predicated region
      $region53: #{cond_embedding_forward.2} parent=35 // pred_check
        %p402 = pneg %p152
      $region54: #{cond_embedding_forward.2} parent=35 // pred_check_branch
        %404 = sbr.rel (%p402) target = $region56
      $region55: #{cond_embedding_forward.2} parent=35 // pred_region
        _
      $region56: #{cond_embedding_forward.2} parent=35 // pred_fallthru
        _
      // Predicated region
      $region57: #{cond_embedding_forward.2} parent=35 // pred_check
        %p405 = pneg %p173
      $region58: #{cond_embedding_forward.2} parent=35 // pred_check_branch
        %407 = sbr.rel (%p405) target = $region60
      $region59: #{cond_embedding_forward.2} parent=35 // pred_region
        _
      $region60: #{cond_embedding_forward.2} parent=35 // pred_fallthru
        _
    $region36: #{cond_embedding_forward.2} parent=5 // pred_fallthru
      _
    %p408 = scmp.le.s32.totalorder 2, %s14
    // Predicated region
    $region61: #{cond_embedding_forward.2} parent=5 // pred_check
      %p409 = pneg %p408
    $region62: #{cond_embedding_forward.2} parent=5 // pred_check_branch
      %411 = sbr.rel (%p409) target = $region64
    $region63: #{cond_embedding_forward.2} parent=5 // pred_region
      %s412 = ssub.s32 %s14, 2
      // Predicated region
      $region65: #{cond_embedding_forward.2} parent=63 // pred_check
        %p413 = pneg %p137
      $region66: #{cond_embedding_forward.2} parent=63 // pred_check_branch
        %415 = sbr.rel (%p413) target = $region68
      $region67: #{cond_embedding_forward.2} parent=63 // pred_region
        %p416 = scmp.lt.s32.totalorder %s20, 3
        %s417 = scalar_select %p416, %s20, 3
        %s418 = smul.addr %s417, 8
        %s419 = scalar_lea.vmem %s4, %s418
      $region68: #{cond_embedding_forward.2} parent=63 // pred_fallthru
        _
    $region64: #{cond_embedding_forward.2} parent=5 // pred_fallthru
      _
  $region6: #{cond_embedding_forward.2} parent=0 // loop_footer
    %s18 = sadd.s32 1, %s14
  $region7: #{cond_embedding_forward.2} parent=0 // loop_footer_branch
    %13 = sbr.rel target = $region3
  $region8: #{cond_embedding_forward.2} parent=0 // loop_exit
    _

</llo_original>
